<compile_context>
chip_gen: v7x
topology: tpu7x:2x2x1
jax: 0.10.0
libtpu: 0.0.40
codegen_flags: <defaults>
</compile_context>

<pallas_src>
import functools

import jax
import jax.numpy as jnp
from jax import lax
from jax.experimental import pallas as pl
from jax.experimental.pallas import tpu as pltpu


def _ffgoalemb_kernel(x_ref, w1_ref, b1_ref, w2_ref, b2_ref, g_ref, beta_ref,
                      o_ref):
    # x_ref: (TM, D_in)   w1_ref: (D_in, H)   b1_ref: (1, H)
    # w2_ref: (H, E)      b2_ref: (1, E)      g_ref/beta_ref: (1, E)
    x = x_ref[...].astype(jnp.float32)

    # ff1 + leaky_relu (negative_slope = 0.01, PyTorch default)
    h = jnp.dot(x, w1_ref[...], preferred_element_type=jnp.float32) + b1_ref[...]
    h = jnp.where(h > 0, h, 0.01 * h)

    # ff2
    y = jnp.dot(h, w2_ref[...], preferred_element_type=jnp.float32) + b2_ref[...]

    # LayerNorm over the last dim (eps = 1e-5, PyTorch default)
    mean = jnp.mean(y, axis=-1, keepdims=True)
    centered = y - mean
    var = jnp.mean(centered * centered, axis=-1, keepdims=True)
    y_norm = centered * lax.rsqrt(var + 1e-5)

    o_ref[...] = (y_norm * g_ref[...] + beta_ref[...]).astype(o_ref.dtype)


@functools.partial(jax.jit, static_argnames=("goal_emb_dim", "zero_embedding",
                                             "tile_m"))
def ff_goal_emb(goals, w1, b1, w2, b2, ln_gamma, ln_beta, *,
                goal_emb_dim=32, zero_embedding=False, tile_m=1024):
    B, L, GL, GD = goals.shape
    if zero_embedding:
        # Matches the PyTorch module: explicit f32 zeros, no kernel launch.
        return jnp.zeros((B, L, goal_emb_dim), dtype=jnp.float32)

    d_in = GL * GD
    hidden = w1.shape[1]
    M = B * L

    # Free (row-major) reshape; keep the native dtype — kernel upcasts to f32,
    # so a bf16 `goals` halves x-side HBM read traffic with identical math.
    x = goals.reshape(M, d_in)

    # Effective row tile: as large as requested to amortize per-step overhead,
    # but no more than ~half the rows (rounded up to a multiple of 8) so the
    # grid keeps >= 2 "parallel" steps for v7x's 2 TensorCores.
    half = -(-M // 2)
    tile_m_eff = max(8, min(tile_m, ((half + 7) // 8) * 8))
    grid_m = pl.cdiv(M, tile_m_eff)

    b1_2d = b1.reshape(1, hidden)
    b2_2d = b2.reshape(1, goal_emb_dim)
    g_2d = ln_gamma.reshape(1, goal_emb_dim)
    beta_2d = ln_beta.reshape(1, goal_emb_dim)

    out = pl.pallas_call(
        _ffgoalemb_kernel,
        out_shape=jax.ShapeDtypeStruct((M, goal_emb_dim), jnp.float32),
        grid_spec=pltpu.PrefetchScalarGridSpec(
            num_scalar_prefetch=0,
            grid=(grid_m,),
            in_specs=[
                pl.BlockSpec((tile_m_eff, d_in), lambda i: (i, 0)),      # x rows
                pl.BlockSpec((d_in, hidden), lambda i: (0, 0)),          # W1
                pl.BlockSpec((1, hidden), lambda i: (0, 0)),             # b1
                pl.BlockSpec((hidden, goal_emb_dim), lambda i: (0, 0)),  # W2
                pl.BlockSpec((1, goal_emb_dim), lambda i: (0, 0)),       # b2
                pl.BlockSpec((1, goal_emb_dim), lambda i: (0, 0)),       # gamma
                pl.BlockSpec((1, goal_emb_dim), lambda i: (0, 0)),       # beta
            ],
            out_specs=pl.BlockSpec((tile_m_eff, goal_emb_dim),
                                   lambda i: (i, 0)),
        ),
        compiler_params=pltpu.CompilerParams(
            dimension_semantics=("parallel",)),
    )(x, w1, b1_2d, w2, b2_2d, g_2d, beta_2d)

    return out.reshape(B, L, goal_emb_dim)


def _reference(goals, w1, b1, w2, b2, g, beta):
    B, L, GL, GD = goals.shape
    x = goals.reshape(B, L, GL * GD).astype(jnp.float32)
    h = x @ w1 + b1
    h = jnp.where(h > 0, h, 0.01 * h)
    y = h @ w2 + b2
    mean = jnp.mean(y, axis=-1, keepdims=True)
    var = jnp.mean((y - mean) ** 2, axis=-1, keepdims=True)
    return (y - mean) / jnp.sqrt(var + 1e-5) * g + beta


if __name__ == "__main__":
    def run_case(B, L, goal_length, goal_dim, goal_emb_dim, key):
        d_in = goal_length * goal_dim      # ff1 in_features
        hidden = 2 * goal_dim              # ff1 out_features / ff2 in_features

        k_goals, k_w1, k_b1, k_w2, k_b2 = jax.random.split(key, 5)
        goals = jax.random.normal(k_goals, (B, L, goal_length, goal_dim),
                                  dtype=jnp.float32)
        # Deterministic synthetic parameters (Linear weights in (in, out) layout).
        w1 = jax.random.normal(k_w1, (d_in, hidden), dtype=jnp.float32) * 0.2
        b1 = jax.random.normal(k_b1, (hidden,), dtype=jnp.float32) * 0.1
        w2 = jax.random.normal(k_w2, (hidden, goal_emb_dim),
                               dtype=jnp.float32) * 0.2
        b2 = jax.random.normal(k_b2, (goal_emb_dim,), dtype=jnp.float32) * 0.1
        ln_gamma = jnp.ones((goal_emb_dim,), dtype=jnp.float32)
        ln_beta = jnp.zeros((goal_emb_dim,), dtype=jnp.float32)

        out = ff_goal_emb(goals, w1, b1, w2, b2, ln_gamma, ln_beta,
                          goal_emb_dim=goal_emb_dim, zero_embedding=False)
        out = jax.block_until_ready(out)

        ref = _reference(goals, w1, b1, w2, b2, ln_gamma, ln_beta)
        assert out.shape == (B, L, goal_emb_dim), out.shape
        assert jnp.allclose(out, ref, atol=1e-5, rtol=1e-5), \
            float(jnp.max(jnp.abs(out - ref)))
        return goals, w1, b1, w2, b2, ln_gamma, ln_beta

    key = jax.random.PRNGKey(0)
    k1, k2 = jax.random.split(key)

    # Case 1: rows divide evenly into tiles (M = 16 -> grid of 2 tiles of 8).
    args = run_case(B=2, L=8, goal_length=3, goal_dim=4, goal_emb_dim=32,
                    key=k1)

    # Case 2: M = 15 -> last block is partial; exercises masked reads/writes
    # of the uneven tail (no wrapper-side padding).
    run_case(B=3, L=5, goal_length=3, goal_dim=4, goal_emb_dim=32, key=k2)

    # zero_embedding path (handled in the wrapper, no kernel needed).
    zero_out = ff_goal_emb(*args, goal_emb_dim=32, zero_embedding=True)
    zero_out = jax.block_until_ready(zero_out)
    assert zero_out.shape == (2, 8, 32)
    assert zero_out.dtype == jnp.float32
    assert jnp.all(zero_out == 0.0)

    print("KERNEL_OK")
</pallas_src>

<mosaic_0001>
module attributes {stable_mosaic.version = 11 : i64} {
  func.func @_ffgoalemb_kernel(%arg0: i32, %arg1: memref<8x12xf32, #tpu.memory_space<vmem>>, %arg2: memref<12x8xf32, #tpu.memory_space<vmem>>, %arg3: memref<1x8xf32, #tpu.memory_space<vmem>>, %arg4: memref<8x32xf32, #tpu.memory_space<vmem>>, %arg5: memref<1x32xf32, #tpu.memory_space<vmem>>, %arg6: memref<1x32xf32, #tpu.memory_space<vmem>>, %arg7: memref<1x32xf32, #tpu.memory_space<vmem>>, %arg8: memref<8x32xf32, #tpu.memory_space<vmem>>) attributes {dimension_semantics = [#tpu.dimension_semantics<parallel>], iteration_bounds = array<i64: 2>, scalar_prefetch = 0 : i64, scratch_operands = 0 : i64, tpu.core_type = #tpu.core_type<tc>, window_params = [{transform_indices = @transform_0, window_bounds = array<i64: 8, 12>}, {pipeline_mode = #tpu.pipeline_mode<synchronous>, transform_indices = @transform_1, window_bounds = array<i64: 12, 8>}, {pipeline_mode = #tpu.pipeline_mode<synchronous>, transform_indices = @transform_2, window_bounds = array<i64: 1, 8>}, {pipeline_mode = #tpu.pipeline_mode<synchronous>, transform_indices = @transform_3, window_bounds = array<i64: 8, 32>}, {pipeline_mode = #tpu.pipeline_mode<synchronous>, transform_indices = @transform_4, window_bounds = array<i64: 1, 32>}, {pipeline_mode = #tpu.pipeline_mode<synchronous>, transform_indices = @transform_5, window_bounds = array<i64: 1, 32>}, {pipeline_mode = #tpu.pipeline_mode<synchronous>, transform_indices = @transform_6, window_bounds = array<i64: 1, 32>}, {transform_indices = @transform_7, window_bounds = array<i64: 8, 32>}]} {
    %c0 = arith.constant 0 : index
    %c0_0 = arith.constant 0 : index
    %0 = vector.load %arg1[%c0, %c0_0] : memref<8x12xf32, #tpu.memory_space<vmem>>, vector<8x12xf32>
    %c0_1 = arith.constant 0 : index
    %c0_2 = arith.constant 0 : index
    %1 = vector.load %arg2[%c0_1, %c0_2] : memref<12x8xf32, #tpu.memory_space<vmem>>, vector<12x8xf32>
    %cst = arith.constant dense<0.000000e+00> : vector<8x8xf32>
    %2 = tpu.matmul %0, %1, %cst {dimension_numbers = #tpu.dot_dimension_numbers<[1], [0], [0], [1], [0, 0, 1, 1], [], []>} : vector<8x12xf32>, vector<12x8xf32>, vector<8x8xf32> -> vector<8x8xf32>
    %c0_3 = arith.constant 0 : index
    %c0_4 = arith.constant 0 : index
    %3 = vector.load %arg3[%c0_3, %c0_4] : memref<1x8xf32, #tpu.memory_space<vmem>>, vector<1x8xf32>
    %4 = vector.broadcast %3 : vector<1x8xf32> to vector<8x8xf32>
    %5 = arith.addf %2, %4 : vector<8x8xf32>
    %cst_5 = arith.constant 0.000000e+00 : f32
    %6 = vector.broadcast %cst_5 : f32 to vector<8x8xf32>
    %7 = arith.cmpf ogt, %5, %6 : vector<8x8xf32>
    %cst_6 = arith.constant 0.00999999977 : f32
    %8 = vector.broadcast %cst_6 : f32 to vector<8x8xf32>
    %9 = arith.mulf %8, %5 : vector<8x8xf32>
    %10 = arith.select %7, %5, %9 : vector<8x8xi1>, vector<8x8xf32>
    %c0_7 = arith.constant 0 : index
    %c0_8 = arith.constant 0 : index
    %11 = vector.load %arg4[%c0_7, %c0_8] : memref<8x32xf32, #tpu.memory_space<vmem>>, vector<8x32xf32>
    %cst_9 = arith.constant dense<0.000000e+00> : vector<8x32xf32>
    %12 = tpu.matmul %10, %11, %cst_9 {dimension_numbers = #tpu.dot_dimension_numbers<[1], [0], [0], [1], [0, 0, 1, 1], [], []>} : vector<8x8xf32>, vector<8x32xf32>, vector<8x32xf32> -> vector<8x32xf32>
    %c0_10 = arith.constant 0 : index
    %c0_11 = arith.constant 0 : index
    %13 = vector.load %arg5[%c0_10, %c0_11] : memref<1x32xf32, #tpu.memory_space<vmem>>, vector<1x32xf32>
    %14 = vector.broadcast %13 : vector<1x32xf32> to vector<8x32xf32>
    %15 = arith.addf %12, %14 : vector<8x32xf32>
    %cst_12 = arith.constant dense<0.000000e+00> : vector<8xf32>
    %16 = vector.multi_reduction <add>, %15, %cst_12 [1] : vector<8x32xf32> to vector<8xf32>
    %17 = vector.shape_cast %16 : vector<8xf32> to vector<8x1xf32>
    %cst_13 = arith.constant 3.200000e+01 : f32
    %18 = vector.broadcast %cst_13 : f32 to vector<8x1xf32>
    %19 = arith.divf %17, %18 : vector<8x1xf32>
    %20 = vector.broadcast %19 : vector<8x1xf32> to vector<8x32xf32>
    %21 = arith.subf %15, %20 : vector<8x32xf32>
    %22 = arith.mulf %21, %21 : vector<8x32xf32>
    %cst_14 = arith.constant dense<0.000000e+00> : vector<8xf32>
    %23 = vector.multi_reduction <add>, %22, %cst_14 [1] : vector<8x32xf32> to vector<8xf32>
    %24 = vector.shape_cast %23 : vector<8xf32> to vector<8x1xf32>
    %cst_15 = arith.constant 3.200000e+01 : f32
    %25 = vector.broadcast %cst_15 : f32 to vector<8x1xf32>
    %26 = arith.divf %24, %25 : vector<8x1xf32>
    %cst_16 = arith.constant 9.99999974E-6 : f32
    %27 = vector.broadcast %cst_16 : f32 to vector<8x1xf32>
    %28 = arith.addf %26, %27 : vector<8x1xf32>
    %29 = math.rsqrt %28 : vector<8x1xf32>
    %30 = vector.broadcast %29 : vector<8x1xf32> to vector<8x32xf32>
    %31 = arith.mulf %21, %30 : vector<8x32xf32>
    %c0_17 = arith.constant 0 : index
    %c0_18 = arith.constant 0 : index
    %32 = vector.load %arg6[%c0_17, %c0_18] : memref<1x32xf32, #tpu.memory_space<vmem>>, vector<1x32xf32>
    %33 = vector.broadcast %32 : vector<1x32xf32> to vector<8x32xf32>
    %34 = arith.mulf %31, %33 : vector<8x32xf32>
    %c0_19 = arith.constant 0 : index
    %c0_20 = arith.constant 0 : index
    %35 = vector.load %arg7[%c0_19, %c0_20] : memref<1x32xf32, #tpu.memory_space<vmem>>, vector<1x32xf32>
    %36 = vector.broadcast %35 : vector<1x32xf32> to vector<8x32xf32>
    %37 = arith.addf %34, %36 : vector<8x32xf32>
    %c0_21 = arith.constant 0 : index
    %c0_22 = arith.constant 0 : index
    %38 = vector.load %arg8[%c0_21, %c0_22] : memref<8x32xf32, #tpu.memory_space<vmem>>, vector<8x32xf32>
    tpu.vector_store %arg8[%c0_21, %c0_22], %37 {strides = array<i32>} : memref<8x32xf32, #tpu.memory_space<vmem>>, vector<8x32xf32>,
    return
  }
  func.func @transform_0(%arg0: i32) -> (i32, i32) {
    %c0_i32 = arith.constant 0 : i32
    %c0_i32_0 = arith.constant 0 : i32
    return %arg0, %c0_i32 : i32, i32
  }
  func.func @transform_1(%arg0: i32) -> (i32, i32) {
    %c0_i32 = arith.constant 0 : i32
    %c0_i32_0 = arith.constant 0 : i32
    %c0_i32_1 = arith.constant 0 : i32
    return %c0_i32, %c0_i32_0 : i32, i32
  }
  func.func @transform_2(%arg0: i32) -> (i32, i32) {
    %c0_i32 = arith.constant 0 : i32
    %c0_i32_0 = arith.constant 0 : i32
    %c0_i32_1 = arith.constant 0 : i32
    return %c0_i32, %c0_i32_0 : i32, i32
  }
  func.func @transform_3(%arg0: i32) -> (i32, i32) {
    %c0_i32 = arith.constant 0 : i32
    %c0_i32_0 = arith.constant 0 : i32
    %c0_i32_1 = arith.constant 0 : i32
    return %c0_i32, %c0_i32_0 : i32, i32
  }
  func.func @transform_4(%arg0: i32) -> (i32, i32) {
    %c0_i32 = arith.constant 0 : i32
    %c0_i32_0 = arith.constant 0 : i32
    %c0_i32_1 = arith.constant 0 : i32
    return %c0_i32, %c0_i32_0 : i32, i32
  }
  func.func @transform_5(%arg0: i32) -> (i32, i32) {
    %c0_i32 = arith.constant 0 : i32
    %c0_i32_0 = arith.constant 0 : i32
    %c0_i32_1 = arith.constant 0 : i32
    return %c0_i32, %c0_i32_0 : i32, i32
  }
  func.func @transform_6(%arg0: i32) -> (i32, i32) {
    %c0_i32 = arith.constant 0 : i32
    %c0_i32_0 = arith.constant 0 : i32
    %c0_i32_1 = arith.constant 0 : i32
    return %c0_i32, %c0_i32_0 : i32, i32
  }
  func.func @transform_7(%arg0: i32) -> (i32, i32) {
    %c0_i32 = arith.constant 0 : i32
    %c0_i32_0 = arith.constant 0 : i32
    return %arg0, %c0_i32 : i32, i32
  }
}

</mosaic_0001>

<llo_original>
// kernel: ff_goal_emb.1
$region0: #{ff_goal_emb.1}
  #allocation0 [shape = 'u32[]', space=smem, size = 0x4, offset = 0x4, fixed_abs, tag = 'smem constant byte address 0x4 - core index']
  #allocation1 [shape = 'u32[144,128]{1,0:T(1,128)}', space=vmem, size = 0x12000, scoped, tag = 'internal scratch']
  %s0 = inlined_call_operand.vmem [shape: f32[16,12], index: 0, kind: input, shape index: {}]
  %s1 = inlined_call_operand.vmem [shape: f32[12,8], index: 1, kind: input, shape index: {}]
  %s2 = inlined_call_operand.vmem [shape: f32[1,8], index: 2, kind: input, shape index: {}]
  %s3 = inlined_call_operand.vmem [shape: f32[8,32], index: 3, kind: input, shape index: {}]
  %s4 = inlined_call_operand.vmem [shape: f32[1,32], index: 4, kind: input, shape index: {}]
  %s5 = inlined_call_operand.vmem [shape: f32[1,32], index: 5, kind: input, shape index: {}]
  %s6 = inlined_call_operand.vmem [shape: f32[1,32], index: 6, kind: input, shape index: {}]
  %s7 = inlined_call_operand.hbm [shape: f32[16,32], index: 7, kind: output, shape index: {}]
  %s8 = sld [smem:[#allocation0]]
  $region61: #{ff_goal_emb.1} parent=0
    _
  %s10 = ssub.s32 1, %s8
  %s11 = scalar_select 0, %s10, %s8
  $region1: #{ff_goal_emb.1} parent=0
    #allocation2 [shape = 'u8[8192]{0}', space=vmem, size = 0x2000, scoped, tag = 'output window, operand 0']
    #allocation3 [shape = 's32[2]{0}', space=sflag, size = 0x8, scoped, tag = 'scoped memory for ff_goal_emb.1']
    %12 = vsyncpa [#allocation3], 0
    %s13 = scalar_lea.sflag [#allocation3], 1
    %14 = vsyncpa %s13, 0
    loop: start=0, step=1, limit=4
    $region2: #{ff_goal_emb.1} parent=1 // loop_pre_header
      _
    $region3: #{ff_goal_emb.1} parent=1 // loop_header
      %s16 = sphi 0, %s20
      %p17 = scmp.ge.s32.totalorder %s16, 4
      %s26 = sphi 0, %s28
      %s29 = sphi 0, %s26
      %s30 = sphi 0, %s29
      %s46 = sphi 0, %s30
      %s50 = sphi 0, %s50
      %s52 = sphi 0, %s50
      %s53 = sphi 0, %s52
      %s67 = sphi 0, %s53
      %s71 = sphi 0, %s71
      %s73 = sphi 0, %s71
      %s74 = sphi 0, %s73
      %s88 = sphi 0, %s74
      %s92 = sphi 0, %s92
      %s94 = sphi 0, %s92
      %s95 = sphi 0, %s94
      %s109 = sphi 0, %s95
      %s113 = sphi 0, %s113
      %s115 = sphi 0, %s113
      %s116 = sphi 0, %s115
      %s130 = sphi 0, %s116
      %s134 = sphi 0, %s134
      %s136 = sphi 0, %s134
      %s137 = sphi 0, %s136
      %s151 = sphi 0, %s137
      %s155 = sphi 0, %s155
      %s157 = sphi 0, %s155
      %s158 = sphi 0, %s157
      %s172 = sphi 0, %s158
      %s178 = sphi 0, %s180
      %s181 = sphi 0, %s178
      %s182 = sphi 0, %s181
      %s198 = sphi 0, %s182
    $region4: #{ff_goal_emb.1} parent=1 // loop_header_branch
      %19 = sbr.rel (%p17) target = $region8
    $region5: #{ff_goal_emb.1} parent=1 // loop_body
      %s21 = ssub.s32 %s16, 1
      %s22 = ssub.s32 %s16, 2
      %s23 = sadd.s32 %s16, 1
      %s24 = ssub.s32 %s16, %s23
      %p25 = scmp.eq.s32.totalorder %s24, 0
      %s27 = sadd.s32 %s26, 1
      %s28 = scalar_select %p25, %s26, %s27
      %p31 = pneg %p25
      %p32 = scmp.eq.s32.totalorder %s16, 1
      %p33 = por %p31, %p32
      %p34 = scmp.ne.s32.totalorder %s26, %s29
      %p35 = scmp.eq.s32.totalorder %s16, 0
      %p36 = por %p34, %p35
      %p37 = scmp.ne.s32.totalorder %s26, %s29
      %p38 = scmp.eq.s32.totalorder %s21, 1
      %p39 = por %p37, %p38
      %p40 = scmp.ne.s32.totalorder %s29, %s30
      %p41 = scmp.eq.s32.totalorder %s21, 0
      %p42 = por %p40, %p41
      %p43 = scmp.ne.s32.totalorder %s29, %s30
      %p44 = scmp.eq.s32.totalorder %s22, 1
      %p45 = por %p43, %p44
      %p47 = scmp.ne.s32.totalorder %s30, %s46
      %p48 = scmp.eq.s32.totalorder %s22, 0
      %p49 = por %p47, %p48
      %s51 = sadd.s32 %s50, 1
      %p54 = scmp.eq.s32.totalorder %s16, 1
      %p55 = scmp.ne.s32.totalorder %s50, %s52
      %p56 = scmp.eq.s32.totalorder %s16, 0
      %p57 = por %p55, %p56
      %p58 = scmp.ne.s32.totalorder %s50, %s52
      %p59 = scmp.eq.s32.totalorder %s21, 1
      %p60 = por %p58, %p59
      %p61 = scmp.ne.s32.totalorder %s52, %s53
      %p62 = scmp.eq.s32.totalorder %s21, 0
      %p63 = por %p61, %p62
      %p64 = scmp.ne.s32.totalorder %s52, %s53
      %p65 = scmp.eq.s32.totalorder %s22, 1
      %p66 = por %p64, %p65
      %p68 = scmp.ne.s32.totalorder %s53, %s67
      %p69 = scmp.eq.s32.totalorder %s22, 0
      %p70 = por %p68, %p69
      %s72 = sadd.s32 %s71, 1
      %p75 = scmp.eq.s32.totalorder %s16, 1
      %p76 = scmp.ne.s32.totalorder %s71, %s73
      %p77 = scmp.eq.s32.totalorder %s16, 0
      %p78 = por %p76, %p77
      %p79 = scmp.ne.s32.totalorder %s71, %s73
      %p80 = scmp.eq.s32.totalorder %s21, 1
      %p81 = por %p79, %p80
      %p82 = scmp.ne.s32.totalorder %s73, %s74
      %p83 = scmp.eq.s32.totalorder %s21, 0
      %p84 = por %p82, %p83
      %p85 = scmp.ne.s32.totalorder %s73, %s74
      %p86 = scmp.eq.s32.totalorder %s22, 1
      %p87 = por %p85, %p86
      %p89 = scmp.ne.s32.totalorder %s74, %s88
      %p90 = scmp.eq.s32.totalorder %s22, 0
      %p91 = por %p89, %p90
      %s93 = sadd.s32 %s92, 1
      %p96 = scmp.eq.s32.totalorder %s16, 1
      %p97 = scmp.ne.s32.totalorder %s92, %s94
      %p98 = scmp.eq.s32.totalorder %s16, 0
      %p99 = por %p97, %p98
      %p100 = scmp.ne.s32.totalorder %s92, %s94
      %p101 = scmp.eq.s32.totalorder %s21, 1
      %p102 = por %p100, %p101
      %p103 = scmp.ne.s32.totalorder %s94, %s95
      %p104 = scmp.eq.s32.totalorder %s21, 0
      %p105 = por %p103, %p104
      %p106 = scmp.ne.s32.totalorder %s94, %s95
      %p107 = scmp.eq.s32.totalorder %s22, 1
      %p108 = por %p106, %p107
      %p110 = scmp.ne.s32.totalorder %s95, %s109
      %p111 = scmp.eq.s32.totalorder %s22, 0
      %p112 = por %p110, %p111
      %s114 = sadd.s32 %s113, 1
      %p117 = scmp.eq.s32.totalorder %s16, 1
      %p118 = scmp.ne.s32.totalorder %s113, %s115
      %p119 = scmp.eq.s32.totalorder %s16, 0
      %p120 = por %p118, %p119
      %p121 = scmp.ne.s32.totalorder %s113, %s115
      %p122 = scmp.eq.s32.totalorder %s21, 1
      %p123 = por %p121, %p122
      %p124 = scmp.ne.s32.totalorder %s115, %s116
      %p125 = scmp.eq.s32.totalorder %s21, 0
      %p126 = por %p124, %p125
      %p127 = scmp.ne.s32.totalorder %s115, %s116
      %p128 = scmp.eq.s32.totalorder %s22, 1
      %p129 = por %p127, %p128
      %p131 = scmp.ne.s32.totalorder %s116, %s130
      %p132 = scmp.eq.s32.totalorder %s22, 0
      %p133 = por %p131, %p132
      %s135 = sadd.s32 %s134, 1
      %p138 = scmp.eq.s32.totalorder %s16, 1
      %p139 = scmp.ne.s32.totalorder %s134, %s136
      %p140 = scmp.eq.s32.totalorder %s16, 0
      %p141 = por %p139, %p140
      %p142 = scmp.ne.s32.totalorder %s134, %s136
      %p143 = scmp.eq.s32.totalorder %s21, 1
      %p144 = por %p142, %p143
      %p145 = scmp.ne.s32.totalorder %s136, %s137
      %p146 = scmp.eq.s32.totalorder %s21, 0
      %p147 = por %p145, %p146
      %p148 = scmp.ne.s32.totalorder %s136, %s137
      %p149 = scmp.eq.s32.totalorder %s22, 1
      %p150 = por %p148, %p149
      %p152 = scmp.ne.s32.totalorder %s137, %s151
      %p153 = scmp.eq.s32.totalorder %s22, 0
      %p154 = por %p152, %p153
      %s156 = sadd.s32 %s155, 1
      %p159 = scmp.eq.s32.totalorder %s16, 1
      %p160 = scmp.ne.s32.totalorder %s155, %s157
      %p161 = scmp.eq.s32.totalorder %s16, 0
      %p162 = por %p160, %p161
      %p163 = scmp.ne.s32.totalorder %s155, %s157
      %p164 = scmp.eq.s32.totalorder %s21, 1
      %p165 = por %p163, %p164
      %p166 = scmp.ne.s32.totalorder %s157, %s158
      %p167 = scmp.eq.s32.totalorder %s21, 0
      %p168 = por %p166, %p167
      %p169 = scmp.ne.s32.totalorder %s157, %s158
      %p170 = scmp.eq.s32.totalorder %s22, 1
      %p171 = por %p169, %p170
      %p173 = scmp.ne.s32.totalorder %s158, %s172
      %p174 = scmp.eq.s32.totalorder %s22, 0
      %p175 = por %p173, %p174
      %s176 = ssub.s32 %s16, %s23
      %p177 = scmp.eq.s32.totalorder %s176, 0
      %s179 = sadd.s32 %s178, 1
      %s180 = scalar_select %p177, %s178, %s179
      %p183 = pneg %p177
      %p184 = scmp.eq.s32.totalorder %s16, 1
      %p185 = por %p183, %p184
      %p186 = scmp.ne.s32.totalorder %s178, %s181
      %p187 = scmp.eq.s32.totalorder %s16, 0
      %p188 = por %p186, %p187
      %p189 = scmp.ne.s32.totalorder %s178, %s181
      %p190 = scmp.eq.s32.totalorder %s21, 1
      %p191 = por %p189, %p190
      %p192 = scmp.ne.s32.totalorder %s181, %s182
      %p193 = scmp.eq.s32.totalorder %s21, 0
      %p194 = por %p192, %p193
      %p195 = scmp.ne.s32.totalorder %s181, %s182
      %p196 = scmp.eq.s32.totalorder %s22, 1
      %p197 = por %p195, %p196
      %p199 = scmp.ne.s32.totalorder %s182, %s198
      %p200 = scmp.eq.s32.totalorder %s22, 0
      %p201 = por %p199, %p200
      %p202 = scmp.le.s32.totalorder 1, %s16
      %p203 = scmp.lt.s32.totalorder %s16, 3
      %p204 = pnand %p202, %p203
      %p205 = pneg %p204
      // Predicated region
      $region9: #{ff_goal_emb.1} parent=5 // pred_check
        _
      $region10: #{ff_goal_emb.1} parent=5 // pred_check_branch
        %207 = sbr.rel (%p204) target = $region12
      $region11: #{ff_goal_emb.1} parent=5 // pred_region
        %s208 = ssub.s32 %s16, 1
        // Predicated region
        $region13: #{ff_goal_emb.1} parent=11 // pred_check
          %p209 = pneg %p63
        $region14: #{ff_goal_emb.1} parent=11 // pred_check_branch
          %211 = sbr.rel (%p209) target = $region16
        $region15: #{ff_goal_emb.1} parent=11 // pred_region
          _
        $region16: #{ff_goal_emb.1} parent=11 // pred_fallthru
          _
        // Predicated region
        $region17: #{ff_goal_emb.1} parent=11 // pred_check
          %p212 = pneg %p84
        $region18: #{ff_goal_emb.1} parent=11 // pred_check_branch
          %214 = sbr.rel (%p212) target = $region20
        $region19: #{ff_goal_emb.1} parent=11 // pred_region
          _
        $region20: #{ff_goal_emb.1} parent=11 // pred_fallthru
          _
        // Predicated region
        $region21: #{ff_goal_emb.1} parent=11 // pred_check
          %p215 = pneg %p105
        $region22: #{ff_goal_emb.1} parent=11 // pred_check_branch
          %217 = sbr.rel (%p215) target = $region24
        $region23: #{ff_goal_emb.1} parent=11 // pred_region
          _
        $region24: #{ff_goal_emb.1} parent=11 // pred_fallthru
          _
        // Predicated region
        $region25: #{ff_goal_emb.1} parent=11 // pred_check
          %p218 = pneg %p126
        $region26: #{ff_goal_emb.1} parent=11 // pred_check_branch
          %220 = sbr.rel (%p218) target = $region28
        $region27: #{ff_goal_emb.1} parent=11 // pred_region
          _
        $region28: #{ff_goal_emb.1} parent=11 // pred_fallthru
          _
        // Predicated region
        $region29: #{ff_goal_emb.1} parent=11 // pred_check
          %p221 = pneg %p147
        $region30: #{ff_goal_emb.1} parent=11 // pred_check_branch
          %223 = sbr.rel (%p221) target = $region32
        $region31: #{ff_goal_emb.1} parent=11 // pred_region
          _
        $region32: #{ff_goal_emb.1} parent=11 // pred_fallthru
          _
        // Predicated region
        $region33: #{ff_goal_emb.1} parent=11 // pred_check
          %p224 = pneg %p168
        $region34: #{ff_goal_emb.1} parent=11 // pred_check_branch
          %226 = sbr.rel (%p224) target = $region36
        $region35: #{ff_goal_emb.1} parent=11 // pred_region
          _
        $region36: #{ff_goal_emb.1} parent=11 // pred_fallthru
          _
      $region12: #{ff_goal_emb.1} parent=5 // pred_fallthru
        _
      %p227 = scmp.lt.s32.totalorder %s16, 2
      // Predicated region
      $region37: #{ff_goal_emb.1} parent=5 // pred_check
        %p228 = pneg %p227
      $region38: #{ff_goal_emb.1} parent=5 // pred_check_branch
        %230 = sbr.rel (%p228) target = $region40
      $region39: #{ff_goal_emb.1} parent=5 // pred_region
        // Predicated region
        $region41: #{ff_goal_emb.1} parent=39 // pred_check
          %p231 = pneg %p36
        $region42: #{ff_goal_emb.1} parent=39 // pred_check_branch
          %233 = sbr.rel (%p231) target = $region44
        $region43: #{ff_goal_emb.1} parent=39 // pred_region
          %p234 = scmp.lt.s32.totalorder %s16, 1
          %s235 = scalar_select %p234, %s16, 1
          %s236 = smul.addr %s235, 8
          %s237 = scalar_lea.vmem %s0, %s236
        $region44: #{ff_goal_emb.1} parent=39 // pred_fallthru
          _
      $region40: #{ff_goal_emb.1} parent=5 // pred_fallthru
        _
      %p238 = scmp.le.s32.totalorder 1, %s16
      %p239 = scmp.lt.s32.totalorder %s16, 3
      %p240 = pnand %p238, %p239
      %p241 = pneg %p240
      // Predicated region
      $region45: #{ff_goal_emb.1} parent=5 // pred_check
        _
      $region46: #{ff_goal_emb.1} parent=5 // pred_check_branch
        %243 = sbr.rel (%p240) target = $region48
      $region47: #{ff_goal_emb.1} parent=5 // pred_region
        %s244 = ssub.s32 %s16, 1
        %p245 = scmp.lt.s32.totalorder %s21, 1
        %s246 = scalar_select %p245, %s21, 1
        %s247 = smul.addr %s246, 8
        %s248 = scalar_lea.vmem %s0, %s247
        %p249 = pneg %p42
        %p250 = pneg %p39
        %p251 = pneg %p63
        %p252 = pneg %p60
        %p253 = pneg %p84
        %p254 = pneg %p81
        %p255 = pneg %p105
        %p256 = pneg %p102
        %p257 = pneg %p126
        %p258 = pneg %p123
        %p259 = pneg %p147
        %p260 = pneg %p144
        %p261 = pneg %p168
        %p262 = pneg %p165
        %p263 = pneg %p194
        %p264 = pneg %p191
        %s265 = sand.u32 %s181, 1
        %s266 = scalar_lea.sflag [#allocation3], %s265
        %s267 = sand.u32 %s181, 1
        %s268 = smul.addr %s267, 8
        %s269 = scalar_lea.vmem [#allocation2], %s268
        %p270 = scmp.lt.s32.totalorder %s21, 1
        %s271 = scalar_select %p270, %s21, 1
        %s272 = smul.addr %s271, 8
        %s273 = scalar_lea.vmem %s0, %s272
        %v274 = vld [vmem:[%s273] sm:$0xff]
        %v275 = vld [vmem:[%s1] sm:$0xff]
        %v276 = vld [vmem:[%s1 + $0x8] sm:$0xf]
        %v277 = vld [vmem:[%s2] sm:$0x1]
        %v279 = vlaneseq
        %v280 = vshrl.u32 %v279, 7
        %v281 = vsub.s32 0, %v280
        %v282 = vrot.slane %v277, %v281
        %vm284 = vcmask 97280
        %v286 = vsel %vm284, %v274, 0
        %vm288 = vcmask 1043456
        %v290 = vsel %vm288, %v276, 0
        %292 = vmatprep.subr.mxu0 0.0
        %293 = vmatpush1.msra.mxu0 %v275
        %294 = vmatprep.subr.mxu0 0.0
        %295 = vmatpush1.msra.mxu0 %v290
        %296 = vmatprep.subr.mxu0 0.0
        %297 = vmatpush1.msra.mxu0 0.0
        %298 = vmatprep.subr.mxu0 0.0
        %299 = vmatpush1.msra.mxu0 0.0
        %300 = vmatprep.subr.mxu0 0.0
        %301 = vmatpush1.msra.mxu0 0.0
        %302 = vmatprep.subr.mxu0 0.0
        %303 = vmatpush1.msra.mxu0 0.0
        %304 = vmatprep.subr.mxu0 0.0
        %305 = vmatpush1.msra.mxu0 0.0
        %306 = vmatprep.subr.mxu0 0.0
        %307 = vmatpush1.msra.mxu0 0.0
        %308 = vmatprep.subr.mxu0 0.0
        %309 = vmatpush1.msra.mxu0 0.0
        %310 = vmatprep.subr.mxu0 0.0
        %311 = vmatpush1.msra.mxu0 0.0
        %312 = vmatprep.subr.mxu0 0.0
        %313 = vmatpush1.msra.mxu0 0.0
        %314 = vmatprep.subr.mxu0 0.0
        %315 = vmatpush1.msra.mxu0 0.0
        %316 = vmatprep.subr.mxu0 0.0
        %317 = vmatpush1.msra.mxu0 0.0
        %318 = vmatprep.subr.mxu0 0.0
        %319 = vmatpush1.msra.mxu0 0.0
        %320 = vmatprep.subr.mxu0 0.0
        %321 = vmatpush1.msra.mxu0 0.0
        %322 = vmatprep.subr.mxu0 0.0
        %323 = vmatpush1.msra.mxu0 0.0
        %324 = vmatprep.subr.mxu0 0.0
        %325 = vmatpush1.msra.mxu0 0.0
        %326 = vmatprep.subr.mxu0 0.0
        %327 = vmatpush1.msra.mxu0 0.0
        %328 = vmatprep.subr.mxu0 0.0
        %329 = vmatpush1.msra.mxu0 0.0
        %330 = vmatprep.subr.mxu0 0.0
        %331 = vmatpush1.msra.mxu0 0.0
        %332 = vmatprep.subr.mxu0 0.0
        %333 = vmatpush1.msra.mxu0 0.0
        %334 = vmatprep.subr.mxu0 0.0
        %335 = vmatpush1.msra.mxu0 0.0
        %336 = vmatprep.subr.mxu0 0.0
        %337 = vmatpush1.msra.mxu0 0.0
        %338 = vmatprep.subr.mxu0 0.0
        %339 = vmatpush1.msra.mxu0 0.0
        %340 = vmatprep.subr.mxu0 0.0
        %341 = vmatpush1.msra.mxu0 0.0
        %342 = vmatprep.subr.mxu0 0.0
        %343 = vmatpush1.msra.mxu0 0.0
        %344 = vmatprep.subr.mxu0 0.0
        %345 = vmatpush1.msra.mxu0 0.0
        %346 = vmatprep.subr.mxu0 0.0
        %347 = vmatpush1.msra.mxu0 0.0
        %348 = vmatprep.subr.mxu0 0.0
        %349 = vmatpush1.msra.mxu0 0.0
        %350 = vmatprep.subr.mxu0 0.0
        %351 = vmatpush1.msra.mxu0 0.0
        %352 = vmatprep.subr.mxu0 0.0
        %353 = vmatpush1.msra.mxu0 0.0
        %354 = vmatprep.subr.mxu0 0.0
        %355 = vmatpush1.msra.mxu0 0.0
        %356 = vmatprep.mubr.f32.mxu0 0.0
        %357 = vmatmul.mubr.f32.gmra.mrb[0].mxu0 %v286
        %v358 = vpop.f32.mrb[0].mxu0
        %v359 = vadd.f32 %v282, %v358
        %v360 = vpop.f32.mrb[0].mxu0
        %361 = vdwg.mxu0
        %vm362 = vcmp.gt.f32.partialorder %v359, 0.0
        %v363 = vmul.f32 %v359, 0.01
        %v364 = vsel %vm362, %v359, %v363
        %v365 = vld [vmem:[%s3] sm:$0xff]
        %v366 = vld [vmem:[%s4] sm:$0x1]
        %v368 = vlaneseq
        %v369 = vshrl.u32 %v368, 7
        %v370 = vsub.s32 0, %v369
        %v371 = vrot.slane %v366, %v370
        %vm373 = vcmask 64512
        %v375 = vsel %vm373, %v364, 0
        %377 = vmatprep.subr.mxu0 0.0
        %378 = vmatpush1.msra.mxu0 %v365
        %379 = vmatprep.subr.mxu0 0.0
        %380 = vmatpush1.msra.mxu0 0.0
        %381 = vmatprep.subr.mxu0 0.0
        %382 = vmatpush1.msra.mxu0 0.0
        %383 = vmatprep.subr.mxu0 0.0
        %384 = vmatpush1.msra.mxu0 0.0
        %385 = vmatprep.subr.mxu0 0.0
        %386 = vmatpush1.msra.mxu0 0.0
        %387 = vmatprep.subr.mxu0 0.0
        %388 = vmatpush1.msra.mxu0 0.0
        %389 = vmatprep.subr.mxu0 0.0
        %390 = vmatpush1.msra.mxu0 0.0
        %391 = vmatprep.subr.mxu0 0.0
        %392 = vmatpush1.msra.mxu0 0.0
        %393 = vmatprep.subr.mxu0 0.0
        %394 = vmatpush1.msra.mxu0 0.0
        %395 = vmatprep.subr.mxu0 0.0
        %396 = vmatpush1.msra.mxu0 0.0
        %397 = vmatprep.subr.mxu0 0.0
        %398 = vmatpush1.msra.mxu0 0.0
        %399 = vmatprep.subr.mxu0 0.0
        %400 = vmatpush1.msra.mxu0 0.0
        %401 = vmatprep.subr.mxu0 0.0
        %402 = vmatpush1.msra.mxu0 0.0
        %403 = vmatprep.subr.mxu0 0.0
        %404 = vmatpush1.msra.mxu0 0.0
        %405 = vmatprep.subr.mxu0 0.0
        %406 = vmatpush1.msra.mxu0 0.0
        %407 = vmatprep.subr.mxu0 0.0
        %408 = vmatpush1.msra.mxu0 0.0
        %409 = vmatprep.subr.mxu0 0.0
        %410 = vmatpush1.msra.mxu0 0.0
        %411 = vmatprep.subr.mxu0 0.0
        %412 = vmatpush1.msra.mxu0 0.0
        %413 = vmatprep.subr.mxu0 0.0
        %414 = vmatpush1.msra.mxu0 0.0
        %415 = vmatprep.subr.mxu0 0.0
        %416 = vmatpush1.msra.mxu0 0.0
        %417 = vmatprep.subr.mxu0 0.0
        %418 = vmatpush1.msra.mxu0 0.0
        %419 = vmatprep.subr.mxu0 0.0
        %420 = vmatpush1.msra.mxu0 0.0
        %421 = vmatprep.subr.mxu0 0.0
        %422 = vmatpush1.msra.mxu0 0.0
        %423 = vmatprep.subr.mxu0 0.0
        %424 = vmatpush1.msra.mxu0 0.0
        %425 = vmatprep.subr.mxu0 0.0
        %426 = vmatpush1.msra.mxu0 0.0
        %427 = vmatprep.subr.mxu0 0.0
        %428 = vmatpush1.msra.mxu0 0.0
        %429 = vmatprep.subr.mxu0 0.0
        %430 = vmatpush1.msra.mxu0 0.0
        %431 = vmatprep.subr.mxu0 0.0
        %432 = vmatpush1.msra.mxu0 0.0
        %433 = vmatprep.subr.mxu0 0.0
        %434 = vmatpush1.msra.mxu0 0.0
        %435 = vmatprep.subr.mxu0 0.0
        %436 = vmatpush1.msra.mxu0 0.0
        %437 = vmatprep.subr.mxu0 0.0
        %438 = vmatpush1.msra.mxu0 0.0
        %439 = vmatprep.subr.mxu0 0.0
        %440 = vmatpush1.msra.mxu0 0.0
        %441 = vmatprep.mubr.f32.mxu0 0.0
        %442 = vmatmul.mubr.f32.gmra.mrb[0].mxu0 %v375
        %v443 = vpop.f32.mrb[0].mxu0
        %v444 = vadd.f32 %v371, %v443
        %v445 = vpop.f32.mrb[0].mxu0
        %446 = vdwg.mxu0
        %vm447 = vcmask 261120
        %v448 = vsel %vm447, %v444, 0.0
        %449 = vadd.xlane.f32.xlu0 %v448
        %v450 = vpop.xlane.xlu0 %449
        %v451 = vrcp.pop 32.0
        %v452 = vmul.f32 %v450, %v451
        %v453 = vsub.f32 %v444, %v452
        %v454 = vmul.f32 %v453, %v453
        %v455 = vsel %vm447, %v454, 0.0
        %456 = vadd.xlane.f32.xlu0 %v455
        %v457 = vpop.xlane.xlu0 %456
        %v458 = vmul.f32 %v457, %v451
        %v459 = vadd.f32 %v458, 1e-05
        %v460 = vrsqrt.pop %v459
        %v461 = vmul.f32 %v453, %v460
        %v462 = vld [vmem:[%s5] sm:$0x1]
        %v464 = vlaneseq
        %v465 = vshrl.u32 %v464, 7
        %v466 = vsub.s32 0, %v465
        %v467 = vrot.slane %v462, %v466
        %v469 = vmul.f32 %v461, %v467
        %v470 = vld [vmem:[%s6] sm:$0x1]
        %v472 = vlaneseq
        %v473 = vshrl.u32 %v472, 7
        %v474 = vsub.s32 0, %v473
        %v475 = vrot.slane %v470, %v474
        %v477 = vadd.f32 %v469, %v475
        %478 = vst.msk [vmem:[%s269] sm:$0xff] %vm447, %v477
        %s479 = sand.u32 %s181, 1
        %s480 = scalar_lea.sflag [#allocation3], %s479
        %s481 = sand.u32 %s181, 1
        %s482 = smul.addr %s481, 8
        %s483 = scalar_lea.vmem [#allocation2], %s482
        // Predicated region
        $region49: #{ff_goal_emb.1} parent=47 // pred_check
          %p484 = pneg %p191
        $region50: #{ff_goal_emb.1} parent=47 // pred_check_branch
          %486 = sbr.rel (%p484) target = $region52
        $region51: #{ff_goal_emb.1} parent=47 // pred_region
          %s488 = ssub.s32 128, 128
          %489 = vsyncadd %s480, %s488
          %s490 = smul.addr %s21, 128
          %s491 = scalar_lea.hbm %s7, %s490
          %s493 = sshll.u32 %s483, 4
          %s494 = int_to_ptr.vmem [resolvable:$true] %s493
          %496 = dma.vmem_to_hbm [thread:$0]  %s494, 128, %s491, %s480
        $region52: #{ff_goal_emb.1} parent=47 // pred_fallthru
          _
      $region48: #{ff_goal_emb.1} parent=5 // pred_fallthru
        _
      %p497 = scmp.le.s32.totalorder 2, %s16
      // Predicated region
      $region53: #{ff_goal_emb.1} parent=5 // pred_check
        %p498 = pneg %p497
      $region54: #{ff_goal_emb.1} parent=5 // pred_check_branch
        %500 = sbr.rel (%p498) target = $region56
      $region55: #{ff_goal_emb.1} parent=5 // pred_region
        %s501 = ssub.s32 %s16, 2
        // Predicated region
        $region57: #{ff_goal_emb.1} parent=55 // pred_check
          %p502 = pneg %p197
        $region58: #{ff_goal_emb.1} parent=55 // pred_check_branch
          %504 = sbr.rel (%p502) target = $region60
        $region59: #{ff_goal_emb.1} parent=55 // pred_region
          %s505 = sand.u32 %s182, 1
          %s506 = scalar_lea.sflag [#allocation3], %s505
          %s507 = sand.u32 %s182, 1
          %s508 = smul.addr %s507, 8
          %s509 = scalar_lea.vmem [#allocation2], %s508
          %510 = dma.done %s506, 128
        $region60: #{ff_goal_emb.1} parent=55 // pred_fallthru
          _
      $region56: #{ff_goal_emb.1} parent=5 // pred_fallthru
        _
    $region6: #{ff_goal_emb.1} parent=1 // loop_footer
      %s20 = sadd.s32 1, %s16
    $region7: #{ff_goal_emb.1} parent=1 // loop_footer_branch
      %15 = sbr.rel target = $region3
    $region8: #{ff_goal_emb.1} parent=1 // loop_exit
      _
    %511 = vsyncpa [#allocation3], 1
    %s512 = scalar_lea.sflag [#allocation3], 1
    %513 = vsyncpa %s512, 1

</llo_original>
